<compile_context>
chip_gen: v7x
topology: tpu7x:2x2x1
jax: 0.10.0
libtpu: 0.0.40
codegen_flags: <defaults>
</compile_context>

<pallas_src>
import functools

import jax
import jax.numpy as jnp
from jax.experimental import pallas as pl


def _make_cutouts_kernel(facs_ref, x_ref, noise_ref, out_ref, *, pool_elems):
    """Single invocation, all cutouts at once.

    facs_ref : VMEM (cutn, 1) f32        per-cutout noise scale
    x_ref    : VMEM (P, D)               space-to-depth input, P = kh*kw,
                                         D = C*cut*cut (lane-dense)
    noise_ref: VMEM (cutn, D)            standard-normal noise
    out_ref  : VMEM (cutn, D)
    """
    x = x_ref[...].astype(jnp.float32)                      # (P, D)

    # Pooling reductions over the P = kh*kw pooling-window positions.
    s = jnp.sum(x, axis=0, keepdims=True)                   # (1, D)
    m = jnp.max(x, axis=0, keepdims=True)                   # (1, D)
    pooled = (s * (1.0 / float(pool_elems)) + m) * 0.5      # (1, D)

    # TODO(synk): Kornia random augmentations (ColorJitter / RandomPerspective /
    # RandomElasticTransform / ...) are stochastic image warps with no clean
    # Pallas equivalent; they are applied as identity here.

    facs = facs_ref[...].astype(jnp.float32)                # (cutn, 1)
    noise = noise_ref[...].astype(jnp.float32)              # (cutn, D)
    out = pooled + facs * noise                             # (cutn, D)
    out_ref[...] = out.astype(out_ref.dtype)


def make_cutouts_pallas(x, noise, facs, cut_size, cutn):
    """x: (1, C, H, W); noise: (cutn, C, cut, cut); facs: (cutn,).

    Returns (cutn, C, cut_size, cut_size) == PyTorch output for batch=1.
    """
    assert x.shape[0] == 1, "module's noise broadcast requires batch == 1"
    _, C, H, W = x.shape
    assert H % cut_size == 0 and W % cut_size == 0
    kh, kw = H // cut_size, W // cut_size
    P = kh * kw
    D = C * cut_size * cut_size

    # Glue: space-to-depth + flatten so the kernel reduces over the leading
    # axis of a lane-dense (P, D) slab.
    #   x_s2d[p, c*cs*cs + i*cs + j] = x[0, c, i*kh + p // kw, j*kw + p % kw]
    # TODO(synk): for very large H,W this transpose is an extra HBM read+write;
    # fuse it into the kernel via strided pl.ds loads from a (C,H,W) pl.ANY ref.
    x_s2d = (
        x[0]
        .reshape(C, cut_size, kh, cut_size, kw)
        .transpose(2, 4, 0, 1, 3)
        .reshape(P, D)
    )
    noise_flat = noise.reshape(cutn, D)
    facs2 = facs.reshape(cutn, 1).astype(jnp.float32)

    kernel = functools.partial(_make_cutouts_kernel, pool_elems=P)

    out_flat = pl.pallas_call(
        kernel,
        out_shape=jax.ShapeDtypeStruct((cutn, D), x.dtype),
        grid=(1,),
        in_specs=[
            pl.BlockSpec((cutn, 1), lambda i: (0, 0)),   # facs
            pl.BlockSpec((P, D), lambda i: (0, 0)),      # x_s2d
            pl.BlockSpec((cutn, D), lambda i: (0, 0)),   # noise
        ],
        out_specs=pl.BlockSpec((cutn, D), lambda i: (0, 0)),
    )(facs2, x_s2d, noise_flat)

    return out_flat.reshape(cutn, C, cut_size, cut_size)


def make_cutouts_ref(x, noise, facs, cut_size, cutn):
    """Pure-JAX reference (adaptive pools reduce to uniform pools here)."""
    _, C, H, W = x.shape
    kh, kw = H // cut_size, W // cut_size
    x5 = x[0].reshape(C, cut_size, kh, cut_size, kw)
    avg = x5.mean(axis=(2, 4))
    mx = x5.max(axis=(2, 4))
    pooled = (avg + mx) / 2.0
    batch = jnp.broadcast_to(pooled[None], (cutn, C, cut_size, cut_size))
    return batch + facs[:, None, None, None] * noise


if __name__ == "__main__":
    # Module config (synthetic, deterministic).
    cut_size = 8
    cutn = 4
    noise_fac = 0.1

    B, C, H, W = 1, 4, 16, 16

    key = jax.random.PRNGKey(0)
    k_x, k_fac, k_noise = jax.random.split(key, 3)

    x = jax.random.normal(k_x, (B, C, H, W), dtype=jnp.float32)
    # facs ~ U(0, noise_fac), one per cutout (PyTorch: new_empty(...).uniform_).
    facs = jax.random.uniform(
        k_fac, (cutn,), dtype=jnp.float32, minval=0.0, maxval=noise_fac)
    # randn_like(batch)
    noise = jax.random.normal(
        k_noise, (cutn, C, cut_size, cut_size), dtype=jnp.float32)

    out = make_cutouts_pallas(x, noise, facs, cut_size, cutn)
    out = jax.block_until_ready(out)

    ref = make_cutouts_ref(x, noise, facs, cut_size, cutn)
    assert out.shape == (cutn * B, C, cut_size, cut_size)
    assert jnp.allclose(out, ref, rtol=1e-5, atol=1e-5)

    print("KERNEL_OK")
</pallas_src>

<mosaic_0001>
module attributes {stable_mosaic.version = 11 : i64} {
  func.func @_make_cutouts_kernel(%arg0: i32, %arg1: memref<4x1xf32, #tpu.memory_space<vmem>>, %arg2: memref<4x256xf32, #tpu.memory_space<vmem>>, %arg3: memref<4x256xf32, #tpu.memory_space<vmem>>, %arg4: memref<4x256xf32, #tpu.memory_space<vmem>>) attributes {dimension_semantics = [#tpu.dimension_semantics<arbitrary>], iteration_bounds = array<i64: 1>, scalar_prefetch = 0 : i64, scratch_operands = 0 : i64, tpu.core_type = #tpu.core_type<tc>, window_params = [{pipeline_mode = #tpu.pipeline_mode<synchronous>, transform_indices = @transform_0, window_bounds = array<i64: 4, 1>}, {pipeline_mode = #tpu.pipeline_mode<synchronous>, transform_indices = @transform_1, window_bounds = array<i64: 4, 256>}, {pipeline_mode = #tpu.pipeline_mode<synchronous>, transform_indices = @transform_2, window_bounds = array<i64: 4, 256>}, {pipeline_mode = #tpu.pipeline_mode<synchronous>, transform_indices = @transform_3, window_bounds = array<i64: 4, 256>}]} {
    %c0 = arith.constant 0 : index
    %c0_0 = arith.constant 0 : index
    %0 = vector.load %arg2[%c0, %c0_0] : memref<4x256xf32, #tpu.memory_space<vmem>>, vector<4x256xf32>
    %cst = arith.constant dense<0.000000e+00> : vector<256xf32>
    %1 = vector.multi_reduction <add>, %0, %cst [0] : vector<4x256xf32> to vector<256xf32>
    %2 = vector.shape_cast %1 : vector<256xf32> to vector<1x256xf32>
    %cst_1 = arith.constant dense<0xFF800000> : vector<256xf32>
    %3 = vector.multi_reduction <maximumf>, %0, %cst_1 [0] : vector<4x256xf32> to vector<256xf32>
    %4 = vector.shape_cast %3 : vector<256xf32> to vector<1x256xf32>
    %cst_2 = arith.constant 2.500000e-01 : f32
    %5 = vector.broadcast %cst_2 : f32 to vector<1x256xf32>
    %6 = arith.mulf %2, %5 : vector<1x256xf32>
    %7 = arith.addf %6, %4 : vector<1x256xf32>
    %cst_3 = arith.constant 5.000000e-01 : f32
    %8 = vector.broadcast %cst_3 : f32 to vector<1x256xf32>
    %9 = arith.mulf %7, %8 : vector<1x256xf32>
    %c0_4 = arith.constant 0 : index
    %c0_5 = arith.constant 0 : index
    %10 = vector.load %arg1[%c0_4, %c0_5] : memref<4x1xf32, #tpu.memory_space<vmem>>, vector<4x1xf32>
    %c0_6 = arith.constant 0 : index
    %c0_7 = arith.constant 0 : index
    %11 = vector.load %arg3[%c0_6, %c0_7] : memref<4x256xf32, #tpu.memory_space<vmem>>, vector<4x256xf32>
    %12 = vector.broadcast %10 : vector<4x1xf32> to vector<4x256xf32>
    %13 = arith.mulf %12, %11 : vector<4x256xf32>
    %14 = vector.broadcast %9 : vector<1x256xf32> to vector<4x256xf32>
    %15 = arith.addf %14, %13 : vector<4x256xf32>
    %c0_8 = arith.constant 0 : index
    %c0_9 = arith.constant 0 : index
    %16 = vector.load %arg4[%c0_8, %c0_9] : memref<4x256xf32, #tpu.memory_space<vmem>>, vector<4x256xf32>
    tpu.vector_store %arg4[%c0_8, %c0_9], %15 {strides = array<i32>} : memref<4x256xf32, #tpu.memory_space<vmem>>, vector<4x256xf32>,
    return
  }
  func.func @transform_0(%arg0: i32) -> (i32, i32) {
    %c0_i32 = arith.constant 0 : i32
    %c0_i32_0 = arith.constant 0 : i32
    %c0_i32_1 = arith.constant 0 : i32
    return %c0_i32, %c0_i32_0 : i32, i32
  }
  func.func @transform_1(%arg0: i32) -> (i32, i32) {
    %c0_i32 = arith.constant 0 : i32
    %c0_i32_0 = arith.constant 0 : i32
    %c0_i32_1 = arith.constant 0 : i32
    return %c0_i32, %c0_i32_0 : i32, i32
  }
  func.func @transform_2(%arg0: i32) -> (i32, i32) {
    %c0_i32 = arith.constant 0 : i32
    %c0_i32_0 = arith.constant 0 : i32
    %c0_i32_1 = arith.constant 0 : i32
    return %c0_i32, %c0_i32_0 : i32, i32
  }
  func.func @transform_3(%arg0: i32) -> (i32, i32) {
    %c0_i32 = arith.constant 0 : i32
    %c0_i32_0 = arith.constant 0 : i32
    %c0_i32_1 = arith.constant 0 : i32
    return %c0_i32, %c0_i32_0 : i32, i32
  }
}

</mosaic_0001>

<llo_original>
// kernel: tpu_custom_call.1
$region0: #{tpu_custom_call.1}
  #allocation0 [shape = 'u32[]', space=smem, size = 0x4, offset = 0x4, fixed_abs, tag = 'smem constant byte address 0x4 - core index']
  #allocation1 [shape = 'u32[144,128]{1,0:T(1,128)}', space=vmem, size = 0x12000, scoped, tag = 'internal scratch']
  %s0 = inlined_call_operand.vmem [shape: f32[4,1], index: 0, kind: input, shape index: {}]
  %s1 = inlined_call_operand.vmem [shape: f32[4,256], index: 1, kind: input, shape index: {}]
  %s2 = inlined_call_operand.hbm [shape: f32[4,256], index: 2, kind: input, shape index: {}]
  %s3 = inlined_call_operand.hbm [shape: f32[4,256], index: 3, kind: output, shape index: {}]
  %s4 = sld [smem:[#allocation0]]
  $region26: #{tpu_custom_call.1} parent=0
    _
  %s6 = ssub.s32 1, %s4
  %s7 = scalar_select 0, %s6, %s4
  $region1: #{tpu_custom_call.1} parent=0
    #allocation2 [shape = 'u8[4096]{0}', space=vmem, size = 0x1000, scoped, tag = 'input window, operand 2, single buffered']
    #allocation3 [shape = 's32[1]{0}', space=sflag, size = 0x4, scoped, tag = 'scoped memory for tpu_custom_call.1']
    #allocation4 [shape = 's32[1]{0}', space=sflag, size = 0x4, scoped, tag = 'scoped memory for tpu_custom_call.1']
    #allocation5 [shape = 'u8[4096]{0}', space=vmem, size = 0x1000, scoped, tag = 'output window, operand 0, single buffered']
    %8 = vsyncpa [#allocation3], 0
    %9 = vsyncpa [#allocation4], 0
    // Predicated region
    $region2: #{tpu_custom_call.1} parent=1 // pred_check
      _
    $region3: #{tpu_custom_call.1} parent=1 // pred_check_branch
      %11 = sbr.rel (0) target = $region5
    $region4: #{tpu_custom_call.1} parent=1 // pred_region
      _
    $region5: #{tpu_custom_call.1} parent=1 // pred_fallthru
      _
    // Predicated region
    $region6: #{tpu_custom_call.1} parent=1 // pred_check
      _
    $region7: #{tpu_custom_call.1} parent=1 // pred_check_branch
      %13 = sbr.rel (0) target = $region9
    $region8: #{tpu_custom_call.1} parent=1 // pred_region
      _
    $region9: #{tpu_custom_call.1} parent=1 // pred_fallthru
      _
    // Predicated region
    $region10: #{tpu_custom_call.1} parent=1 // pred_check
      _
    $region11: #{tpu_custom_call.1} parent=1 // pred_check_branch
      %15 = sbr.rel (0) target = $region13
    $region12: #{tpu_custom_call.1} parent=1 // pred_region
      %s17 = ssub.s32 128, 128
      %18 = vsyncadd [#allocation3], %s17
      %s20 = sshll.u32 [#allocation2], 4
      %s21 = int_to_ptr.vmem [resolvable:$true] %s20
      %23 = dma.hbm_to_vmem [thread:$0]  %s2, 128, %s21, [#allocation3]
    $region13: #{tpu_custom_call.1} parent=1 // pred_fallthru
      _
    // Predicated region
    $region14: #{tpu_custom_call.1} parent=1 // pred_check
      _
    $region15: #{tpu_custom_call.1} parent=1 // pred_check_branch
      %25 = sbr.rel (0) target = $region17
    $region16: #{tpu_custom_call.1} parent=1 // pred_region
      %26 = dma.done [#allocation3], 128
    $region17: #{tpu_custom_call.1} parent=1 // pred_fallthru
      _
    %v27 = vld [vmem:[%s1] sm:$0xff]
    %v29 = vcombine.high %v27, %v27
    %vm31 = vcmask 1043456
    %v32 = vsel %vm31, %v27, 0.0
    %v33 = vrot.slane %v32, 4
    %v34 = vadd.f32 %v32, %v33
    %v35 = vrot.slane %v34, 2
    %v36 = vadd.f32 %v34, %v35
    %v37 = vrot.slane %v36, 1
    %v38 = vadd.f32 %v36, %v37
    %v39 = vsel %vm31, %v29, 0.0
    %v40 = vrot.slane %v39, 4
    %v41 = vadd.f32 %v39, %v40
    %v42 = vrot.slane %v41, 2
    %v43 = vadd.f32 %v41, %v42
    %v44 = vrot.slane %v43, 1
    %v45 = vadd.f32 %v43, %v44
    %v46 = vsel %vm31, %v27, -inf
    %v47 = vrot.slane %v46, 4
    %v48 = vmax.f32 %v46, %v47
    %v49 = vrot.slane %v48, 2
    %v50 = vmax.f32 %v48, %v49
    %v51 = vrot.slane %v50, 1
    %v52 = vmax.f32 %v50, %v51
    %v53 = vsel %vm31, %v29, -inf
    %v54 = vrot.slane %v53, 4
    %v55 = vmax.f32 %v53, %v54
    %v56 = vrot.slane %v55, 2
    %v57 = vmax.f32 %v55, %v56
    %v58 = vrot.slane %v57, 1
    %v59 = vmax.f32 %v57, %v58
    %v60 = vmul.f32 %v38, 0.25
    %v61 = vmul.f32 %v45, 0.25
    %v62 = vadd.f32 %v60, %v52
    %v63 = vadd.f32 %v61, %v59
    %v64 = vmul.f32 %v62, 0.5
    %v65 = vmul.f32 %v63, 0.5
    %v66 = vld [vmem:[%s0] sm:$0xf]
    %v67 = vld [vmem:[#allocation2] sm:$0xff]
    %69 = vset.pattern.permute.xlu0 0
    %70 = vperm.xlu0 %69, %v66
    %v71 = vpop.permute.xlu0 %70
    %v74 = vcombine.high %v67, %v67
    %v76 = vmul.f32 %v71, %v67
    %v77 = vmul.f32 %v71, %v74
    %v78 = vadd.f32 %v64, %v76
    %v79 = vadd.f32 %v65, %v77
    %v82 = vcombine.low %v78, %v79
    %84 = vst [vmem:[#allocation5] sm:$0xff] %v82
    // Predicated region
    $region18: #{tpu_custom_call.1} parent=1 // pred_check
      _
    $region19: #{tpu_custom_call.1} parent=1 // pred_check_branch
      %86 = sbr.rel (0) target = $region21
    $region20: #{tpu_custom_call.1} parent=1 // pred_region
      %s88 = ssub.s32 128, 128
      %89 = vsyncadd [#allocation4], %s88
      %s91 = sshll.u32 [#allocation5], 4
      %s92 = int_to_ptr.vmem [resolvable:$true] %s91
      %94 = dma.vmem_to_hbm [thread:$0]  %s92, 128, %s3, [#allocation4]
    $region21: #{tpu_custom_call.1} parent=1 // pred_fallthru
      _
    // Predicated region
    $region22: #{tpu_custom_call.1} parent=1 // pred_check
      _
    $region23: #{tpu_custom_call.1} parent=1 // pred_check_branch
      %96 = sbr.rel (0) target = $region25
    $region24: #{tpu_custom_call.1} parent=1 // pred_region
      %97 = dma.done [#allocation4], 128
    $region25: #{tpu_custom_call.1} parent=1 // pred_fallthru
      _
    %98 = vsyncpa [#allocation3], 1
    %99 = vsyncpa [#allocation4], 1

</llo_original>
